<compile_context>
chip_gen: v6e
topology: v6e:2x2x1
jax: 0.10.0
libtpu: 0.0.40
codegen_flags: <defaults>
</compile_context>

<pallas_src>
import jax
import jax.numpy as jnp
from jax.experimental import pallas as pl
from jax.experimental.pallas import tpu as pltpu

NEG_BIG = -1e30  # sentinel for padded class lanes (exp underflows to 0)


def gnn_kernel(a_ref, x_ref, w1_ref, b1_ref, w2_ref, b2_ref, out_ref):
    a = a_ref[...]          # bf16 [N, N]   normalized adjacency (reused twice)
    b1 = b1_ref[...]        # f32  [1, H]   hoisted: loaded/broadcast once
    b2 = b2_ref[...]        # f32  [1, Cp]  padded lanes hold NEG_BIG

    f_in = x_ref.shape[1]
    hidden = w1_ref.shape[1]

    # ---- Layer 1: A_norm @ X @ W1 + b1, then ReLU.
    #      Pay the N^2 (aggregation) matmul on the smaller of {F_in, hidden};
    #      the branch is resolved at trace time. ----
    if hidden > f_in:
        ax = jnp.dot(a, x_ref[...], preferred_element_type=jnp.float32)
        h = jnp.dot(ax.astype(jnp.bfloat16), w1_ref[...],
                    preferred_element_type=jnp.float32)
    else:
        xw = jnp.dot(x_ref[...], w1_ref[...], preferred_element_type=jnp.float32)
        h = jnp.dot(a, xw.astype(jnp.bfloat16),
                    preferred_element_type=jnp.float32)
    h = jnp.maximum(h + b1, 0.0)
    # TODO(synk): F.dropout(p=0.25, training=True) not implemented; forward here
    # matches eval mode (identity), per the module's inference semantics.

    # ---- Layer 2: A_norm @ (H @ W2) + b2, class dim padded to 128 lanes.
    #      Padded W2 lanes are 0, so A @ HW is 0 there; adding b2 puts them at
    #      NEG_BIG. ----
    hw = jnp.dot(h.astype(jnp.bfloat16), w2_ref[...],
                 preferred_element_type=jnp.float32)
    h2 = jnp.dot(a, hw.astype(jnp.bfloat16),
                 preferred_element_type=jnp.float32) + b2

    # ---- log_softmax over the (padded) class lanes.  Padded logits sit at
    #      -1e30: exp underflows to 0, so max / lse match the unpadded result. ----
    m = jnp.max(h2, axis=1, keepdims=True)
    z = h2 - m
    lse = jnp.log(jnp.sum(jnp.exp(z), axis=1, keepdims=True))
    out_ref[...] = z - lse


@jax.jit
def gnn_forward(a_norm, x, w1, b1, w2, b2):
    n, f_in = x.shape
    hidden = w1.shape[1]
    c = w2.shape[1]
    c_pad = pl.cdiv(c, 128) * 128           # lane-dense output (40 -> 128)

    # bf16 matmul operands (halves DMA bytes, MXU-native); elementwise stays f32.
    a_bf = a_norm.astype(jnp.bfloat16)
    x_bf = x.astype(jnp.bfloat16)
    w1_bf = w1.astype(jnp.bfloat16)
    w2_bf = (jnp.zeros((hidden, c_pad), jnp.float32)
             .at[:, :c].set(w2).astype(jnp.bfloat16))
    b1_f = jnp.asarray(b1, jnp.float32).reshape(1, hidden)
    b2_p = jnp.full((1, c_pad), NEG_BIG, jnp.float32).at[:, :c].set(
        jnp.asarray(b2, jnp.float32).reshape(1, c))

    inputs = (a_bf, x_bf, w1_bf, b1_f, w2_bf, b2_p)
    io_bytes = sum(int(v.size) * v.dtype.itemsize for v in inputs) + n * c_pad * 4
    flops = (2 * n * n * min(f_in, hidden)    # aggregation matmul (layer 1)
             + 2 * n * f_in * hidden          # feature transform (layer 1)
             + 2 * n * hidden * c_pad         # feature transform (layer 2)
             + 2 * n * n * c_pad)             # aggregation matmul (layer 2)

    def full(shape):
        # Whole-array block; grid has a single step so index_map is constant.
        return pl.BlockSpec(shape, lambda i: (0, 0))

    out_p = pl.pallas_call(
        gnn_kernel,
        out_shape=jax.ShapeDtypeStruct((n, c_pad), jnp.float32),
        grid=(1,),
        in_specs=[full(v.shape) for v in inputs],
        out_specs=full((n, c_pad)),
        compiler_params=pltpu.CompilerParams(
            dimension_semantics=("arbitrary",),
            vmem_limit_bytes=int(max(8 << 20, 4 * io_bytes)),
        ),
        cost_estimate=pl.CostEstimate(
            flops=flops,
            transcendentals=n * c_pad + n,    # exp per lane + log per row
            bytes_accessed=io_bytes,
        ),
    )(*inputs)
    # TODO(synk): for large graphs, tile the node dim over row blocks ("parallel")
    # and the contraction over K blocks ("arbitrary") with a VMEM accumulator,
    # splitting the two layers into separate pallas_calls (layer 2 needs full H).
    return out_p[:, :c]


def build_norm_adj(edge_index, num_nodes):
    """Dense symmetric-normalized adjacency with self-loops (GCNConv gcn_norm)."""
    src, dst = edge_index[0], edge_index[1]
    a = jnp.zeros((num_nodes, num_nodes), jnp.float32).at[dst, src].set(1.0)
    a = a * (1.0 - jnp.eye(num_nodes, dtype=jnp.float32))  # drop any raw self-loops
    a = a + jnp.eye(num_nodes, dtype=jnp.float32)          # add self-loops (fill=1)
    deg = jnp.sum(a, axis=1)                                # deg over targets (rows)
    dinv = jnp.where(deg > 0, 1.0 / jnp.sqrt(deg), 0.0)
    return a * dinv[:, None] * dinv[None, :]


def glorot(key, shape):
    fan_in, fan_out = shape
    limit = jnp.sqrt(6.0 / (fan_in + fan_out))
    return jax.random.uniform(key, shape, jnp.float32, -limit, limit)


def ref_forward(a, x, w1, b1, w2, b2):
    """Plain-JAX reference replicating the kernel's bf16-matmul / f32-accum numerics."""
    bf, f32 = jnp.bfloat16, jnp.float32
    a_bf = a.astype(bf)
    if w1.shape[1] > x.shape[1]:
        ax = jnp.dot(a_bf, x.astype(bf), preferred_element_type=f32)
        h = jnp.dot(ax.astype(bf), w1.astype(bf), preferred_element_type=f32)
    else:
        xw = jnp.dot(x.astype(bf), w1.astype(bf), preferred_element_type=f32)
        h = jnp.dot(a_bf, xw.astype(bf), preferred_element_type=f32)
    h = jnp.maximum(h + b1, 0.0)
    hw = jnp.dot(h.astype(bf), w2.astype(bf), preferred_element_type=f32)
    h2 = jnp.dot(a_bf, hw.astype(bf), preferred_element_type=f32) + b2
    return jax.nn.log_softmax(h2, axis=1)


if __name__ == "__main__":
    # Small shapes consistent with the module (N scaled down, feature dims as in spec).
    num_nodes = 64
    input_dim = 128
    hidden_channel = 512
    num_categories = 40
    num_edges = 256

    key = jax.random.PRNGKey(0)
    kx, ks, kd, kw1, kw2 = jax.random.split(key, 5)

    # Node features and a random (undirected) edge_index [2, E].
    x = jax.random.normal(kx, (num_nodes, input_dim), jnp.float32)
    src = jax.random.randint(ks, (num_edges,), 0, num_nodes)
    dst = jax.random.randint(kd, (num_edges,), 0, num_nodes)
    edge_index = jnp.stack(
        [jnp.concatenate([src, dst]), jnp.concatenate([dst, src])], axis=0
    )
    a_norm = build_norm_adj(edge_index, num_nodes)

    # Deterministic parameter init (GCNConv: weight [F_in, F_out], bias [F_out]).
    w1 = glorot(kw1, (input_dim, hidden_channel))
    b1 = jnp.zeros((1, hidden_channel), jnp.float32)
    w2 = glorot(kw2, (hidden_channel, num_categories))
    b2 = jnp.zeros((1, num_categories), jnp.float32)

    out = gnn_forward(a_norm, x, w1, b1, w2, b2)
    out = jax.block_until_ready(out)

    ref = ref_forward(a_norm, x, w1, b1, w2, b2)
    assert out.shape == (num_nodes, num_categories)
    assert jnp.all(jnp.isfinite(out)), "non-finite values in output"
    assert jnp.allclose(out, ref, atol=1e-3, rtol=1e-3), "mismatch vs reference"

    print("KERNEL_OK")
</pallas_src>

<mosaic_0001>
module attributes {stable_mosaic.version = 11 : i64} {
  func.func @gnn_kernel(%arg0: i32, %arg1: memref<64x64xbf16, #tpu.memory_space<vmem>>, %arg2: memref<64x128xbf16, #tpu.memory_space<vmem>>, %arg3: memref<128x512xbf16, #tpu.memory_space<vmem>>, %arg4: memref<1x512xf32, #tpu.memory_space<vmem>>, %arg5: memref<512x128xbf16, #tpu.memory_space<vmem>>, %arg6: memref<1x128xf32, #tpu.memory_space<vmem>>, %arg7: memref<64x128xf32, #tpu.memory_space<vmem>>) attributes {dimension_semantics = [#tpu.dimension_semantics<arbitrary>], iteration_bounds = array<i64: 1>, scalar_prefetch = 0 : i64, scratch_operands = 0 : i64, tpu.core_type = #tpu.core_type<tc>, window_params = [{pipeline_mode = #tpu.pipeline_mode<synchronous>, transform_indices = @transform_0, window_bounds = array<i64: 64, 64>}, {pipeline_mode = #tpu.pipeline_mode<synchronous>, transform_indices = @transform_1, window_bounds = array<i64: 64, 128>}, {pipeline_mode = #tpu.pipeline_mode<synchronous>, transform_indices = @transform_2, window_bounds = array<i64: 128, 512>}, {pipeline_mode = #tpu.pipeline_mode<synchronous>, transform_indices = @transform_3, window_bounds = array<i64: 1, 512>}, {pipeline_mode = #tpu.pipeline_mode<synchronous>, transform_indices = @transform_4, window_bounds = array<i64: 512, 128>}, {pipeline_mode = #tpu.pipeline_mode<synchronous>, transform_indices = @transform_5, window_bounds = array<i64: 1, 128>}, {pipeline_mode = #tpu.pipeline_mode<synchronous>, transform_indices = @transform_6, window_bounds = array<i64: 64, 128>}]} {
    %c0 = arith.constant 0 : index
    %c0_0 = arith.constant 0 : index
    %0 = vector.load %arg1[%c0, %c0_0] : memref<64x64xbf16, #tpu.memory_space<vmem>>, vector<64x64xbf16>
    %c0_1 = arith.constant 0 : index
    %c0_2 = arith.constant 0 : index
    %1 = vector.load %arg4[%c0_1, %c0_2] : memref<1x512xf32, #tpu.memory_space<vmem>>, vector<1x512xf32>
    %c0_3 = arith.constant 0 : index
    %c0_4 = arith.constant 0 : index
    %2 = vector.load %arg6[%c0_3, %c0_4] : memref<1x128xf32, #tpu.memory_space<vmem>>, vector<1x128xf32>
    %c0_5 = arith.constant 0 : index
    %c0_6 = arith.constant 0 : index
    %3 = vector.load %arg2[%c0_5, %c0_6] : memref<64x128xbf16, #tpu.memory_space<vmem>>, vector<64x128xbf16>
    %cst = arith.constant dense<0.000000e+00> : vector<64x128xf32>
    %4 = tpu.matmul %0, %3, %cst {dimension_numbers = #tpu.dot_dimension_numbers<[1], [0], [0], [1], [0, 0, 1, 1], [], []>} : vector<64x64xbf16>, vector<64x128xbf16>, vector<64x128xf32> -> vector<64x128xf32>
    %5 = arith.truncf %4 : vector<64x128xf32> to vector<64x128xbf16>
    %c0_7 = arith.constant 0 : index
    %c0_8 = arith.constant 0 : index
    %6 = vector.load %arg3[%c0_7, %c0_8] : memref<128x512xbf16, #tpu.memory_space<vmem>>, vector<128x512xbf16>
    %cst_9 = arith.constant dense<0.000000e+00> : vector<64x512xf32>
    %7 = tpu.matmul %5, %6, %cst_9 {dimension_numbers = #tpu.dot_dimension_numbers<[1], [0], [0], [1], [0, 0, 1, 1], [], []>} : vector<64x128xbf16>, vector<128x512xbf16>, vector<64x512xf32> -> vector<64x512xf32>
    %8 = vector.broadcast %1 : vector<1x512xf32> to vector<64x512xf32>
    %9 = arith.addf %7, %8 : vector<64x512xf32>
    %cst_10 = arith.constant 0.000000e+00 : f32
    %10 = vector.broadcast %cst_10 : f32 to vector<64x512xf32>
    %11 = arith.maximumf %9, %10 : vector<64x512xf32>
    %12 = arith.truncf %11 : vector<64x512xf32> to vector<64x512xbf16>
    %c0_11 = arith.constant 0 : index
    %c0_12 = arith.constant 0 : index
    %13 = vector.load %arg5[%c0_11, %c0_12] : memref<512x128xbf16, #tpu.memory_space<vmem>>, vector<512x128xbf16>
    %cst_13 = arith.constant dense<0.000000e+00> : vector<64x128xf32>
    %14 = tpu.matmul %12, %13, %cst_13 {dimension_numbers = #tpu.dot_dimension_numbers<[1], [0], [0], [1], [0, 0, 1, 1], [], []>} : vector<64x512xbf16>, vector<512x128xbf16>, vector<64x128xf32> -> vector<64x128xf32>
    %15 = arith.truncf %14 : vector<64x128xf32> to vector<64x128xbf16>
    %cst_14 = arith.constant dense<0.000000e+00> : vector<64x128xf32>
    %16 = tpu.matmul %0, %15, %cst_14 {dimension_numbers = #tpu.dot_dimension_numbers<[1], [0], [0], [1], [0, 0, 1, 1], [], []>} : vector<64x64xbf16>, vector<64x128xbf16>, vector<64x128xf32> -> vector<64x128xf32>
    %17 = vector.broadcast %2 : vector<1x128xf32> to vector<64x128xf32>
    %18 = arith.addf %16, %17 : vector<64x128xf32>
    %cst_15 = arith.constant dense<0xFF800000> : vector<64xf32>
    %19 = vector.multi_reduction <maximumf>, %18, %cst_15 [1] : vector<64x128xf32> to vector<64xf32>
    %20 = vector.shape_cast %19 : vector<64xf32> to vector<64x1xf32>
    %21 = vector.broadcast %20 : vector<64x1xf32> to vector<64x128xf32>
    %22 = arith.subf %18, %21 : vector<64x128xf32>
    %23 = math.exp %22 : vector<64x128xf32>
    %cst_16 = arith.constant dense<0.000000e+00> : vector<64xf32>
    %24 = vector.multi_reduction <add>, %23, %cst_16 [1] : vector<64x128xf32> to vector<64xf32>
    %25 = vector.shape_cast %24 : vector<64xf32> to vector<64x1xf32>
    %26 = math.log %25 : vector<64x1xf32>
    %27 = vector.broadcast %26 : vector<64x1xf32> to vector<64x128xf32>
    %28 = arith.subf %22, %27 : vector<64x128xf32>
    %c0_17 = arith.constant 0 : index
    %c0_18 = arith.constant 0 : index
    %29 = vector.load %arg7[%c0_17, %c0_18] : memref<64x128xf32, #tpu.memory_space<vmem>>, vector<64x128xf32>
    tpu.vector_store %arg7[%c0_17, %c0_18], %28 {strides = array<i32>} : memref<64x128xf32, #tpu.memory_space<vmem>>, vector<64x128xf32>,
    return
  }
  func.func @transform_0(%arg0: i32) -> (i32, i32) {
    %c0_i32 = arith.constant 0 : i32
    %c0_i32_0 = arith.constant 0 : i32
    %c0_i32_1 = arith.constant 0 : i32
    return %c0_i32, %c0_i32_0 : i32, i32
  }
  func.func @transform_1(%arg0: i32) -> (i32, i32) {
    %c0_i32 = arith.constant 0 : i32
    %c0_i32_0 = arith.constant 0 : i32
    %c0_i32_1 = arith.constant 0 : i32
    return %c0_i32, %c0_i32_0 : i32, i32
  }
  func.func @transform_2(%arg0: i32) -> (i32, i32) {
    %c0_i32 = arith.constant 0 : i32
    %c0_i32_0 = arith.constant 0 : i32
    %c0_i32_1 = arith.constant 0 : i32
    return %c0_i32, %c0_i32_0 : i32, i32
  }
  func.func @transform_3(%arg0: i32) -> (i32, i32) {
    %c0_i32 = arith.constant 0 : i32
    %c0_i32_0 = arith.constant 0 : i32
    %c0_i32_1 = arith.constant 0 : i32
    return %c0_i32, %c0_i32_0 : i32, i32
  }
  func.func @transform_4(%arg0: i32) -> (i32, i32) {
    %c0_i32 = arith.constant 0 : i32
    %c0_i32_0 = arith.constant 0 : i32
    %c0_i32_1 = arith.constant 0 : i32
    return %c0_i32, %c0_i32_0 : i32, i32
  }
  func.func @transform_5(%arg0: i32) -> (i32, i32) {
    %c0_i32 = arith.constant 0 : i32
    %c0_i32_0 = arith.constant 0 : i32
    %c0_i32_1 = arith.constant 0 : i32
    return %c0_i32, %c0_i32_0 : i32, i32
  }
  func.func @transform_6(%arg0: i32) -> (i32, i32) {
    %c0_i32 = arith.constant 0 : i32
    %c0_i32_0 = arith.constant 0 : i32
    %c0_i32_1 = arith.constant 0 : i32
    return %c0_i32, %c0_i32_0 : i32, i32
  }
}

</mosaic_0001>

<llo_original>
// kernel: gnn_forward.1
$region0: #{gnn_forward.1}
  #allocation0 [shape = 'u32[]', space=smem, size = 0x4, offset = 0x4, fixed_abs, tag = 'smem constant byte address 0x4 - core index']
  #allocation1 [shape = 'u32[144,128]{1,0:T(1,128)}', space=vmem, size = 0x12000, scoped, tag = 'internal scratch']
  %s0 = inlined_call_operand.vmem [shape: bf16[64,64], index: 0, kind: input, shape index: {}]
  %s1 = inlined_call_operand.vmem [shape: bf16[64,128], index: 1, kind: input, shape index: {}]
  %s2 = inlined_call_operand.vmem [shape: bf16[128,512], index: 2, kind: input, shape index: {}]
  %s3 = inlined_call_operand.vmem [shape: f32[1,512], index: 3, kind: input, shape index: {}]
  %s4 = inlined_call_operand.vmem [shape: bf16[512,128], index: 4, kind: input, shape index: {}]
  %s5 = inlined_call_operand.vmem [shape: f32[1,128], index: 5, kind: input, shape index: {}]
  %s6 = inlined_call_operand.vmem [shape: f32[64,128], index: 6, kind: output, shape index: {}]
  %s7 = sld [smem:[#allocation0]]
  $region34: #{gnn_forward.1} parent=0
    _
  %s9 = ssub.s32 1, %s7
  %s10 = scalar_select 0, %s9, %s7
  // Predicated region
  $region2: #{gnn_forward.1} parent=0 // pred_check
    _
  $region3: #{gnn_forward.1} parent=0 // pred_check_branch
    %12 = sbr.rel (0) target = $region5
  $region4: #{gnn_forward.1} parent=0 // pred_region
    _
  $region5: #{gnn_forward.1} parent=0 // pred_fallthru
    _
  // Predicated region
  $region6: #{gnn_forward.1} parent=0 // pred_check
    _
  $region7: #{gnn_forward.1} parent=0 // pred_check_branch
    %14 = sbr.rel (0) target = $region9
  $region8: #{gnn_forward.1} parent=0 // pred_region
    _
  $region9: #{gnn_forward.1} parent=0 // pred_fallthru
    _
  // Predicated region
  $region10: #{gnn_forward.1} parent=0 // pred_check
    _
  $region11: #{gnn_forward.1} parent=0 // pred_check_branch
    %16 = sbr.rel (0) target = $region13
  $region12: #{gnn_forward.1} parent=0 // pred_region
    _
  $region13: #{gnn_forward.1} parent=0 // pred_fallthru
    _
  // Predicated region
  $region14: #{gnn_forward.1} parent=0 // pred_check
    _
  $region15: #{gnn_forward.1} parent=0 // pred_check_branch
    %18 = sbr.rel (0) target = $region17
  $region16: #{gnn_forward.1} parent=0 // pred_region
    _
  $region17: #{gnn_forward.1} parent=0 // pred_fallthru
    _
  // Predicated region
  $region18: #{gnn_forward.1} parent=0 // pred_check
    _
  $region19: #{gnn_forward.1} parent=0 // pred_check_branch
    %20 = sbr.rel (0) target = $region21
  $region20: #{gnn_forward.1} parent=0 // pred_region
    _
  $region21: #{gnn_forward.1} parent=0 // pred_fallthru
    _
  // Predicated region
  $region22: #{gnn_forward.1} parent=0 // pred_check
    _
  $region23: #{gnn_forward.1} parent=0 // pred_check_branch
    %22 = sbr.rel (0) target = $region25
  $region24: #{gnn_forward.1} parent=0 // pred_region
    _
  $region25: #{gnn_forward.1} parent=0 // pred_fallthru
    _
  %v24 = vld [vmem:[%s0] sm:$0xf]
  %v25 = vld [vmem:[%s0 + $0x4] sm:$0xf]
  %v26 = vld [vmem:[%s0 + $0x8] sm:$0xf]
  %v27 = vld [vmem:[%s0 + $0xc] sm:$0xf]
  %v28 = vld [vmem:[%s0 + $0x10] sm:$0xf]
  %v29 = vld [vmem:[%s0 + $0x14] sm:$0xf]
  %v30 = vld [vmem:[%s0 + $0x18] sm:$0xf]
  %v31 = vld [vmem:[%s0 + $0x1c] sm:$0xf]
  %v32 = vld [vmem:[%s3] sm:$0xf]
  %v33 = vld [vmem:[%s5] sm:$0x1]
  %v34 = vld [vmem:[%s1] sm:$0xf]
  %v35 = vld [vmem:[%s1 + $0x4] sm:$0xf]
  %v36 = vld [vmem:[%s1 + $0x8] sm:$0xf]
  %v37 = vld [vmem:[%s1 + $0xc] sm:$0xf]
  %v38 = vld [vmem:[%s1 + $0x10] sm:$0xf]
  %v39 = vld [vmem:[%s1 + $0x14] sm:$0xf]
  %v40 = vld [vmem:[%s1 + $0x18] sm:$0xf]
  %v41 = vld [vmem:[%s1 + $0x1c] sm:$0xf]
  %v50 = vunpack.c.l.b16 %v24
  %v51 = vunpack.c.l.b16 %v25
  %v52 = vunpack.c.l.b16 %v26
  %v53 = vunpack.c.l.b16 %v27
  %v54 = vunpack.c.l.b16 %v28
  %v55 = vunpack.c.l.b16 %v29
  %v56 = vunpack.c.l.b16 %v30
  %v57 = vunpack.c.l.b16 %v31
  %v58 = vpack.c.b16 %v51, %v50
  %v59 = vpack.c.b16 %v53, %v52
  %v60 = vpack.c.b16 %v55, %v54
  %v61 = vpack.c.b16 %v57, %v56
  %v70 = vunpack.c.l.b16 %v34
  %v71 = vunpack.c.l.b16 %v35
  %v72 = vunpack.c.l.b16 %v36
  %v73 = vunpack.c.l.b16 %v37
  %v74 = vunpack.c.l.b16 %v38
  %v75 = vunpack.c.l.b16 %v39
  %v76 = vunpack.c.l.b16 %v40
  %v77 = vunpack.c.l.b16 %v41
  %v78 = vpack.c.b16 %v71, %v70
  %v79 = vpack.c.b16 %v73, %v72
  %v80 = vpack.c.b16 %v75, %v74
  %v81 = vpack.c.b16 %v77, %v76
  %vm86 = vcmask 523264
  %v88 = vsel %vm86, %v58, 0
  %v91 = vsel %vm86, %v59, 0
  %v94 = vsel %vm86, %v60, 0
  %v97 = vsel %vm86, %v61, 0
  %99 = vmatprep.subr.bf16.mxu0 0
  %100 = vmatpush1.bf16.msra.mxu0 0
  %101 = vmatprep.subr.bf16.mxu0 0
  %102 = vmatpush1.bf16.msra.mxu0 0
  %103 = vmatprep.subr.bf16.mxu0 0
  %104 = vmatpush1.bf16.msra.mxu0 0
  %105 = vmatprep.subr.bf16.mxu0 0
  %106 = vmatpush1.bf16.msra.mxu0 0
  %107 = vmatprep.subr.bf16.mxu0 0
  %108 = vmatpush1.bf16.msra.mxu0 %v81
  %109 = vmatprep.subr.bf16.mxu0 0
  %110 = vmatpush1.bf16.msra.mxu0 %v80
  %111 = vmatprep.subr.bf16.mxu0 0
  %112 = vmatpush1.bf16.msra.mxu0 %v79
  %113 = vmatprep.subr.bf16.mxu0 0
  %114 = vmatpush1.bf16.msra.mxu0 %v78
  %115 = vmatprep.subr.bf16.mxu0 0
  %116 = vmatpush2.bf16.msra.mxu0 0
  %117 = vmatprep.subr.bf16.mxu0 0
  %118 = vmatpush2.bf16.msra.mxu0 0
  %119 = vmatprep.subr.bf16.mxu0 0
  %120 = vmatpush2.bf16.msra.mxu0 0
  %121 = vmatprep.subr.bf16.mxu0 0
  %122 = vmatpush2.bf16.msra.mxu0 0
  %123 = vmatprep.subr.bf16.mxu0 0
  %124 = vmatpush2.bf16.msra.mxu0 0
  %125 = vmatprep.subr.bf16.mxu0 0
  %126 = vmatpush2.bf16.msra.mxu0 0
  %127 = vmatprep.subr.bf16.mxu0 0
  %128 = vmatpush2.bf16.msra.mxu0 0
  %129 = vmatprep.subr.bf16.mxu0 0
  %130 = vmatpush2.bf16.msra.mxu0 0
  %131 = vmatprep.mubr.bf16.mxu0 0
  %132 = vmatmul.mubr.bf16.gmra.mxu0 %v88
  %v133 = vpop.f32.mrf.mxu0
  %v134 = vadd.f32 0.0, %v133
  %v135 = vpop.f32.mrf.mxu0
  %v136 = vpop.f32.mrf.mxu0
  %v137 = vadd.f32 0.0, %v136
  %v138 = vpop.f32.mrf.mxu0
  %139 = vmatprep.mubr.bf16.mxu0 0
  %140 = vmatmul.mubr.bf16.gmra.mxu0 %v91
  %v141 = vpop.f32.mrf.mxu0
  %v142 = vadd.f32 0.0, %v141
  %v143 = vpop.f32.mrf.mxu0
  %v144 = vpop.f32.mrf.mxu0
  %v145 = vadd.f32 0.0, %v144
  %v146 = vpop.f32.mrf.mxu0
  %147 = vmatprep.mubr.bf16.mxu0 0
  %148 = vmatmul.mubr.bf16.gmra.mxu0 %v94
  %v149 = vpop.f32.mrf.mxu0
  %v150 = vadd.f32 0.0, %v149
  %v151 = vpop.f32.mrf.mxu0
  %v152 = vpop.f32.mrf.mxu0
  %v153 = vadd.f32 0.0, %v152
  %v154 = vpop.f32.mrf.mxu0
  %155 = vmatprep.mubr.bf16.mxu0 0
  %156 = vmatmul.mubr.bf16.gmra.mxu0 %v97
  %v157 = vpop.f32.mrf.mxu0
  %v158 = vadd.f32 0.0, %v157
  %v159 = vpop.f32.mrf.mxu0
  %v160 = vpop.f32.mrf.mxu0
  %v161 = vadd.f32 0.0, %v160
  %v162 = vpop.f32.mrf.mxu0
  %163 = vdwg.mxu0
  %v164 = vpack.c.bf16 %v137, %v134
  %v165 = vpack.c.bf16 %v145, %v142
  %v166 = vpack.c.bf16 %v153, %v150
  %v167 = vpack.c.bf16 %v161, %v158
  %v168 = vld [vmem:[%s2] sm:$0xff]
  %v169 = vld [vmem:[%s2 + $0x8] sm:$0xff]
  %v170 = vld [vmem:[%s2 + $0x10] sm:$0xff]
  %v171 = vld [vmem:[%s2 + $0x18] sm:$0xff]
  %v172 = vld [vmem:[%s2 + $0x20] sm:$0xff]
  %v173 = vld [vmem:[%s2 + $0x28] sm:$0xff]
  %v174 = vld [vmem:[%s2 + $0x30] sm:$0xff]
  %v175 = vld [vmem:[%s2 + $0x38] sm:$0xff]
  %v176 = vld [vmem:[%s2 + $0x40] sm:$0xff]
  %v177 = vld [vmem:[%s2 + $0x48] sm:$0xff]
  %v178 = vld [vmem:[%s2 + $0x50] sm:$0xff]
  %v179 = vld [vmem:[%s2 + $0x58] sm:$0xff]
  %v180 = vld [vmem:[%s2 + $0x60] sm:$0xff]
  %v181 = vld [vmem:[%s2 + $0x68] sm:$0xff]
  %v182 = vld [vmem:[%s2 + $0x70] sm:$0xff]
  %v183 = vld [vmem:[%s2 + $0x78] sm:$0xff]
  %v184 = vld [vmem:[%s2 + $0x80] sm:$0xff]
  %v185 = vld [vmem:[%s2 + $0x88] sm:$0xff]
  %v186 = vld [vmem:[%s2 + $0x90] sm:$0xff]
  %v187 = vld [vmem:[%s2 + $0x98] sm:$0xff]
  %v188 = vld [vmem:[%s2 + $0xa0] sm:$0xff]
  %v189 = vld [vmem:[%s2 + $0xa8] sm:$0xff]
  %v190 = vld [vmem:[%s2 + $0xb0] sm:$0xff]
  %v191 = vld [vmem:[%s2 + $0xb8] sm:$0xff]
  %v192 = vld [vmem:[%s2 + $0xc0] sm:$0xff]
  %v193 = vld [vmem:[%s2 + $0xc8] sm:$0xff]
  %v194 = vld [vmem:[%s2 + $0xd0] sm:$0xff]
  %v195 = vld [vmem:[%s2 + $0xd8] sm:$0xff]
  %v196 = vld [vmem:[%s2 + $0xe0] sm:$0xff]
  %v197 = vld [vmem:[%s2 + $0xe8] sm:$0xff]
  %v198 = vld [vmem:[%s2 + $0xf0] sm:$0xff]
  %v199 = vld [vmem:[%s2 + $0xf8] sm:$0xff]
  %v201 = vlaneseq
  %v202 = vshrl.u32 %v201, 7
  %v203 = vsub.s32 0, %v202
  %v204 = vrot.slane %v32, %v203
  %v205 = vlaneseq
  %v206 = vshrl.u32 %v205, 7
  %v207 = vsub.s32 1, %v206
  %v208 = vrot.slane %v32, %v207
  %v209 = vlaneseq
  %v210 = vshrl.u32 %v209, 7
  %v211 = vsub.s32 2, %v210
  %v212 = vrot.slane %v32, %v211
  %v213 = vlaneseq
  %v214 = vshrl.u32 %v213, 7
  %v215 = vsub.s32 3, %v214
  %v216 = vrot.slane %v32, %v215
  %v253 = vunpack.c.l.b16 %v168
  %v254 = vunpack.c.h.b16 %v168
  %v255 = vunpack.c.l.b16 %v169
  %v256 = vunpack.c.h.b16 %v169
  %v257 = vunpack.c.l.b16 %v170
  %v258 = vunpack.c.h.b16 %v170
  %v259 = vunpack.c.l.b16 %v171
  %v260 = vunpack.c.h.b16 %v171
  %v261 = vunpack.c.l.b16 %v172
  %v262 = vunpack.c.h.b16 %v172
  %v263 = vunpack.c.l.b16 %v173
  %v264 = vunpack.c.h.b16 %v173
  %v265 = vunpack.c.l.b16 %v174
  %v266 = vunpack.c.h.b16 %v174
  %v267 = vunpack.c.l.b16 %v175
  %v268 = vunpack.c.h.b16 %v175
  %v269 = vunpack.c.l.b16 %v176
  %v270 = vunpack.c.h.b16 %v176
  %v271 = vunpack.c.l.b16 %v177
  %v272 = vunpack.c.h.b16 %v177
  %v273 = vunpack.c.l.b16 %v178
  %v274 = vunpack.c.h.b16 %v178
  %v275 = vunpack.c.l.b16 %v179
  %v276 = vunpack.c.h.b16 %v179
  %v277 = vunpack.c.l.b16 %v180
  %v278 = vunpack.c.h.b16 %v180
  %v279 = vunpack.c.l.b16 %v181
  %v280 = vunpack.c.h.b16 %v181
  %v281 = vunpack.c.l.b16 %v182
  %v282 = vunpack.c.h.b16 %v182
  %v283 = vunpack.c.l.b16 %v183
  %v284 = vunpack.c.h.b16 %v183
  %v285 = vunpack.c.l.b16 %v184
  %v286 = vunpack.c.h.b16 %v184
  %v287 = vunpack.c.l.b16 %v185
  %v288 = vunpack.c.h.b16 %v185
  %v289 = vunpack.c.l.b16 %v186
  %v290 = vunpack.c.h.b16 %v186
  %v291 = vunpack.c.l.b16 %v187
  %v292 = vunpack.c.h.b16 %v187
  %v293 = vunpack.c.l.b16 %v188
  %v294 = vunpack.c.h.b16 %v188
  %v295 = vunpack.c.l.b16 %v189
  %v296 = vunpack.c.h.b16 %v189
  %v297 = vunpack.c.l.b16 %v190
  %v298 = vunpack.c.h.b16 %v190
  %v299 = vunpack.c.l.b16 %v191
  %v300 = vunpack.c.h.b16 %v191
  %v301 = vunpack.c.l.b16 %v192
  %v302 = vunpack.c.h.b16 %v192
  %v303 = vunpack.c.l.b16 %v193
  %v304 = vunpack.c.h.b16 %v193
  %v305 = vunpack.c.l.b16 %v194
  %v306 = vunpack.c.h.b16 %v194
  %v307 = vunpack.c.l.b16 %v195
  %v308 = vunpack.c.h.b16 %v195
  %v309 = vunpack.c.l.b16 %v196
  %v310 = vunpack.c.h.b16 %v196
  %v311 = vunpack.c.l.b16 %v197
  %v312 = vunpack.c.h.b16 %v197
  %v313 = vunpack.c.l.b16 %v198
  %v314 = vunpack.c.h.b16 %v198
  %v315 = vunpack.c.l.b16 %v199
  %v316 = vunpack.c.h.b16 %v199
  %v317 = vpack.c.b16 %v257, %v253
  %v318 = vpack.c.b16 %v258, %v254
  %v319 = vpack.c.b16 %v259, %v255
  %v320 = vpack.c.b16 %v260, %v256
  %v321 = vpack.c.b16 %v265, %v261
  %v322 = vpack.c.b16 %v266, %v262
  %v323 = vpack.c.b16 %v267, %v263
  %v324 = vpack.c.b16 %v268, %v264
  %v325 = vpack.c.b16 %v273, %v269
  %v326 = vpack.c.b16 %v274, %v270
  %v327 = vpack.c.b16 %v275, %v271
  %v328 = vpack.c.b16 %v276, %v272
  %v329 = vpack.c.b16 %v281, %v277
  %v330 = vpack.c.b16 %v282, %v278
  %v331 = vpack.c.b16 %v283, %v279
  %v332 = vpack.c.b16 %v284, %v280
  %v333 = vpack.c.b16 %v289, %v285
  %v334 = vpack.c.b16 %v290, %v286
  %v335 = vpack.c.b16 %v291, %v287
  %v336 = vpack.c.b16 %v292, %v288
  %v337 = vpack.c.b16 %v297, %v293
  %v338 = vpack.c.b16 %v298, %v294
  %v339 = vpack.c.b16 %v299, %v295
  %v340 = vpack.c.b16 %v300, %v296
  %v341 = vpack.c.b16 %v305, %v301
  %v342 = vpack.c.b16 %v306, %v302
  %v343 = vpack.c.b16 %v307, %v303
  %v344 = vpack.c.b16 %v308, %v304
  %v345 = vpack.c.b16 %v313, %v309
  %v346 = vpack.c.b16 %v314, %v310
  %v347 = vpack.c.b16 %v315, %v311
  %v348 = vpack.c.b16 %v316, %v312
  %381 = vmatprep.subr.bf16.mxu0 %v346
  %382 = vmatpush1.bf16.msra.mxu0 %v345
  %383 = vmatprep.subr.bf16.mxu0 %v342
  %384 = vmatpush1.bf16.msra.mxu0 %v341
  %385 = vmatprep.subr.bf16.mxu0 %v338
  %386 = vmatpush1.bf16.msra.mxu0 %v337
  %387 = vmatprep.subr.bf16.mxu0 %v334
  %388 = vmatpush1.bf16.msra.mxu0 %v333
  %389 = vmatprep.subr.bf16.mxu0 %v330
  %390 = vmatpush1.bf16.msra.mxu0 %v329
  %391 = vmatprep.subr.bf16.mxu0 %v326
  %392 = vmatpush1.bf16.msra.mxu0 %v325
  %393 = vmatprep.subr.bf16.mxu0 %v322
  %394 = vmatpush1.bf16.msra.mxu0 %v321
  %395 = vmatprep.subr.bf16.mxu0 %v318
  %396 = vmatpush1.bf16.msra.mxu0 %v317
  %397 = vmatprep.subr.bf16.mxu0 0
  %398 = vmatpush2.bf16.msra.mxu0 0
  %399 = vmatprep.subr.bf16.mxu0 0
  %400 = vmatpush2.bf16.msra.mxu0 0
  %401 = vmatprep.subr.bf16.mxu0 0
  %402 = vmatpush2.bf16.msra.mxu0 0
  %403 = vmatprep.subr.bf16.mxu0 0
  %404 = vmatpush2.bf16.msra.mxu0 0
  %405 = vmatprep.subr.bf16.mxu0 0
  %406 = vmatpush2.bf16.msra.mxu0 0
  %407 = vmatprep.subr.bf16.mxu0 0
  %408 = vmatpush2.bf16.msra.mxu0 0
  %409 = vmatprep.subr.bf16.mxu0 0
  %410 = vmatpush2.bf16.msra.mxu0 0
  %411 = vmatprep.subr.bf16.mxu0 0
  %412 = vmatpush2.bf16.msra.mxu0 0
  %413 = vmatprep.mubr.bf16.mxu0 0
  %414 = vmatmul.mubr.bf16.gmra.mxu0 %v164
  %v415 = vpop.f32.mrf.mxu0
  %v416 = vadd.f32 %v204, %v415
  %v417 = vpop.f32.mrf.mxu0
  %v418 = vadd.f32 %v208, %v417
  %v419 = vpop.f32.mrf.mxu0
  %v420 = vadd.f32 %v204, %v419
  %v421 = vpop.f32.mrf.mxu0
  %v422 = vadd.f32 %v208, %v421
  %423 = vmatprep.mubr.bf16.mxu0 0
  %424 = vmatmul.mubr.bf16.gmra.mxu0 %v165
  %v425 = vpop.f32.mrf.mxu0
  %v426 = vadd.f32 %v204, %v425
  %v427 = vpop.f32.mrf.mxu0
  %v428 = vadd.f32 %v208, %v427
  %v429 = vpop.f32.mrf.mxu0
  %v430 = vadd.f32 %v204, %v429
  %v431 = vpop.f32.mrf.mxu0
  %v432 = vadd.f32 %v208, %v431
  %433 = vmatprep.mubr.bf16.mxu0 0
  %434 = vmatmul.mubr.bf16.gmra.mxu0 %v166
  %v435 = vpop.f32.mrf.mxu0
  %v436 = vadd.f32 %v204, %v435
  %v437 = vpop.f32.mrf.mxu0
  %v438 = vadd.f32 %v208, %v437
  %v439 = vpop.f32.mrf.mxu0
  %v440 = vadd.f32 %v204, %v439
  %v441 = vpop.f32.mrf.mxu0
  %v442 = vadd.f32 %v208, %v441
  %443 = vmatprep.mubr.bf16.mxu0 0
  %444 = vmatmul.mubr.bf16.gmra.mxu0 %v167
  %v445 = vpop.f32.mrf.mxu0
  %v446 = vadd.f32 %v204, %v445
  %v447 = vpop.f32.mrf.mxu0
  %v448 = vadd.f32 %v208, %v447
  %v449 = vpop.f32.mrf.mxu0
  %v450 = vadd.f32 %v204, %v449
  %v451 = vpop.f32.mrf.mxu0
  %v452 = vadd.f32 %v208, %v451
  %453 = vdwg.mxu0
  %454 = vmatprep.subr.bf16.mxu0 %v348
  %455 = vmatpush1.bf16.msra.mxu0 %v347
  %456 = vmatprep.subr.bf16.mxu0 %v344
  %457 = vmatpush1.bf16.msra.mxu0 %v343
  %458 = vmatprep.subr.bf16.mxu0 %v340
  %459 = vmatpush1.bf16.msra.mxu0 %v339
  %460 = vmatprep.subr.bf16.mxu0 %v336
  %461 = vmatpush1.bf16.msra.mxu0 %v335
  %462 = vmatprep.subr.bf16.mxu0 %v332
  %463 = vmatpush1.bf16.msra.mxu0 %v331
  %464 = vmatprep.subr.bf16.mxu0 %v328
  %465 = vmatpush1.bf16.msra.mxu0 %v327
  %466 = vmatprep.subr.bf16.mxu0 %v324
  %467 = vmatpush1.bf16.msra.mxu0 %v323
  %468 = vmatprep.subr.bf16.mxu0 %v320
  %469 = vmatpush1.bf16.msra.mxu0 %v319
  %470 = vmatprep.subr.bf16.mxu0 0
  %471 = vmatpush2.bf16.msra.mxu0 0
  %472 = vmatprep.subr.bf16.mxu0 0
  %473 = vmatpush2.bf16.msra.mxu0 0
  %474 = vmatprep.subr.bf16.mxu0 0
  %475 = vmatpush2.bf16.msra.mxu0 0
  %476 = vmatprep.subr.bf16.mxu0 0
  %477 = vmatpush2.bf16.msra.mxu0 0
  %478 = vmatprep.subr.bf16.mxu0 0
  %479 = vmatpush2.bf16.msra.mxu0 0
  %480 = vmatprep.subr.bf16.mxu0 0
  %481 = vmatpush2.bf16.msra.mxu0 0
  %482 = vmatprep.subr.bf16.mxu0 0
  %483 = vmatpush2.bf16.msra.mxu0 0
  %484 = vmatprep.subr.bf16.mxu0 0
  %485 = vmatpush2.bf16.msra.mxu0 0
  %486 = vmatprep.mubr.bf16.mxu0 0
  %487 = vmatmul.mubr.bf16.gmra.mxu0 %v164
  %v488 = vpop.f32.mrf.mxu0
  %v489 = vadd.f32 %v212, %v488
  %v490 = vpop.f32.mrf.mxu0
  %v491 = vadd.f32 %v216, %v490
  %v492 = vpop.f32.mrf.mxu0
  %v493 = vadd.f32 %v212, %v492
  %v494 = vpop.f32.mrf.mxu0
  %v495 = vadd.f32 %v216, %v494
  %496 = vmatprep.mubr.bf16.mxu0 0
  %497 = vmatmul.mubr.bf16.gmra.mxu0 %v165
  %v498 = vpop.f32.mrf.mxu0
  %v499 = vadd.f32 %v212, %v498
  %v500 = vpop.f32.mrf.mxu0
  %v501 = vadd.f32 %v216, %v500
  %v502 = vpop.f32.mrf.mxu0
  %v503 = vadd.f32 %v212, %v502
  %v504 = vpop.f32.mrf.mxu0
  %v505 = vadd.f32 %v216, %v504
  %506 = vmatprep.mubr.bf16.mxu0 0
  %507 = vmatmul.mubr.bf16.gmra.mxu0 %v166
  %v508 = vpop.f32.mrf.mxu0
  %v509 = vadd.f32 %v212, %v508
  %v510 = vpop.f32.mrf.mxu0
  %v511 = vadd.f32 %v216, %v510
  %v512 = vpop.f32.mrf.mxu0
  %v513 = vadd.f32 %v212, %v512
  %v514 = vpop.f32.mrf.mxu0
  %v515 = vadd.f32 %v216, %v514
  %516 = vmatprep.mubr.bf16.mxu0 0
  %517 = vmatmul.mubr.bf16.gmra.mxu0 %v167
  %v518 = vpop.f32.mrf.mxu0
  %v519 = vadd.f32 %v212, %v518
  %v520 = vpop.f32.mrf.mxu0
  %v521 = vadd.f32 %v216, %v520
  %v522 = vpop.f32.mrf.mxu0
  %v523 = vadd.f32 %v212, %v522
  %v524 = vpop.f32.mrf.mxu0
  %v525 = vadd.f32 %v216, %v524
  %526 = vdwg.mxu0
  %v527 = vmax.f32 %v416, 0.0
  %v528 = vmax.f32 %v418, 0.0
  %v529 = vmax.f32 %v489, 0.0
  %v530 = vmax.f32 %v491, 0.0
  %v531 = vmax.f32 %v420, 0.0
  %v532 = vmax.f32 %v422, 0.0
  %v533 = vmax.f32 %v493, 0.0
  %v534 = vmax.f32 %v495, 0.0
  %v535 = vmax.f32 %v426, 0.0
  %v536 = vmax.f32 %v428, 0.0
  %v537 = vmax.f32 %v499, 0.0
  %v538 = vmax.f32 %v501, 0.0
  %v539 = vmax.f32 %v430, 0.0
  %v540 = vmax.f32 %v432, 0.0
  %v541 = vmax.f32 %v503, 0.0
  %v542 = vmax.f32 %v505, 0.0
  %v543 = vmax.f32 %v436, 0.0
  %v544 = vmax.f32 %v438, 0.0
  %v545 = vmax.f32 %v509, 0.0
  %v546 = vmax.f32 %v511, 0.0
  %v547 = vmax.f32 %v440, 0.0
  %v548 = vmax.f32 %v442, 0.0
  %v549 = vmax.f32 %v513, 0.0
  %v550 = vmax.f32 %v515, 0.0
  %v551 = vmax.f32 %v446, 0.0
  %v552 = vmax.f32 %v448, 0.0
  %v553 = vmax.f32 %v519, 0.0
  %v554 = vmax.f32 %v521, 0.0
  %v555 = vmax.f32 %v450, 0.0
  %v556 = vmax.f32 %v452, 0.0
  %v557 = vmax.f32 %v523, 0.0
  %v558 = vmax.f32 %v525, 0.0
  %v559 = vpack.c.bf16 %v531, %v527
  %v560 = vpack.c.bf16 %v532, %v528
  %v561 = vpack.c.bf16 %v533, %v529
  %v562 = vpack.c.bf16 %v534, %v530
  %v563 = vpack.c.bf16 %v539, %v535
  %v564 = vpack.c.bf16 %v540, %v536
  %v565 = vpack.c.bf16 %v541, %v537
  %v566 = vpack.c.bf16 %v542, %v538
  %v567 = vpack.c.bf16 %v547, %v543
  %v568 = vpack.c.bf16 %v548, %v544
  %v569 = vpack.c.bf16 %v549, %v545
  %v570 = vpack.c.bf16 %v550, %v546
  %v571 = vpack.c.bf16 %v555, %v551
  %v572 = vpack.c.bf16 %v556, %v552
  %v573 = vpack.c.bf16 %v557, %v553
  %v574 = vpack.c.bf16 %v558, %v554
  %v575 = vld [vmem:[%s4] sm:$0xf]
  %v576 = vld [vmem:[%s4 + $0x4] sm:$0xf]
  %v577 = vld [vmem:[%s4 + $0x8] sm:$0xf]
  %v578 = vld [vmem:[%s4 + $0xc] sm:$0xf]
  %v579 = vld [vmem:[%s4 + $0x10] sm:$0xf]
  %v580 = vld [vmem:[%s4 + $0x14] sm:$0xf]
  %v581 = vld [vmem:[%s4 + $0x18] sm:$0xf]
  %v582 = vld [vmem:[%s4 + $0x1c] sm:$0xf]
  %v583 = vld [vmem:[%s4 + $0x20] sm:$0xf]
  %v584 = vld [vmem:[%s4 + $0x24] sm:$0xf]
  %v585 = vld [vmem:[%s4 + $0x28] sm:$0xf]
  %v586 = vld [vmem:[%s4 + $0x2c] sm:$0xf]
  %v587 = vld [vmem:[%s4 + $0x30] sm:$0xf]
  %v588 = vld [vmem:[%s4 + $0x34] sm:$0xf]
  %v589 = vld [vmem:[%s4 + $0x38] sm:$0xf]
  %v590 = vld [vmem:[%s4 + $0x3c] sm:$0xf]
  %v591 = vld [vmem:[%s4 + $0x40] sm:$0xf]
  %v592 = vld [vmem:[%s4 + $0x44] sm:$0xf]
  %v593 = vld [vmem:[%s4 + $0x48] sm:$0xf]
  %v594 = vld [vmem:[%s4 + $0x4c] sm:$0xf]
  %v595 = vld [vmem:[%s4 + $0x50] sm:$0xf]
  %v596 = vld [vmem:[%s4 + $0x54] sm:$0xf]
  %v597 = vld [vmem:[%s4 + $0x58] sm:$0xf]
  %v598 = vld [vmem:[%s4 + $0x5c] sm:$0xf]
  %v599 = vld [vmem:[%s4 + $0x60] sm:$0xf]
  %v600 = vld [vmem:[%s4 + $0x64] sm:$0xf]
  %v601 = vld [vmem:[%s4 + $0x68] sm:$0xf]
  %v602 = vld [vmem:[%s4 + $0x6c] sm:$0xf]
  %v603 = vld [vmem:[%s4 + $0x70] sm:$0xf]
  %v604 = vld [vmem:[%s4 + $0x74] sm:$0xf]
  %v605 = vld [vmem:[%s4 + $0x78] sm:$0xf]
  %v606 = vld [vmem:[%s4 + $0x7c] sm:$0xf]
  %v607 = vld [vmem:[%s4 + $0x80] sm:$0xf]
  %v608 = vld [vmem:[%s4 + $0x84] sm:$0xf]
  %v609 = vld [vmem:[%s4 + $0x88] sm:$0xf]
  %v610 = vld [vmem:[%s4 + $0x8c] sm:$0xf]
  %v611 = vld [vmem:[%s4 + $0x90] sm:$0xf]
  %v612 = vld [vmem:[%s4 + $0x94] sm:$0xf]
  %v613 = vld [vmem:[%s4 + $0x98] sm:$0xf]
  %v614 = vld [vmem:[%s4 + $0x9c] sm:$0xf]
  %v615 = vld [vmem:[%s4 + $0xa0] sm:$0xf]
  %v616 = vld [vmem:[%s4 + $0xa4] sm:$0xf]
  %v617 = vld [vmem:[%s4 + $0xa8] sm:$0xf]
  %v618 = vld [vmem:[%s4 + $0xac] sm:$0xf]
  %v619 = vld [vmem:[%s4 + $0xb0] sm:$0xf]
  %v620 = vld [vmem:[%s4 + $0xb4] sm:$0xf]
  %v621 = vld [vmem:[%s4 + $0xb8] sm:$0xf]
  %v622 = vld [vmem:[%s4 + $0xbc] sm:$0xf]
  %v623 = vld [vmem:[%s4 + $0xc0] sm:$0xf]
  %v624 = vld [vmem:[%s4 + $0xc4] sm:$0xf]
  %v625 = vld [vmem:[%s4 + $0xc8] sm:$0xf]
  %v626 = vld [vmem:[%s4 + $0xcc] sm:$0xf]
  %v627 = vld [vmem:[%s4 + $0xd0] sm:$0xf]
  %v628 = vld [vmem:[%s4 + $0xd4] sm:$0xf]
  %v629 = vld [vmem:[%s4 + $0xd8] sm:$0xf]
  %v630 = vld [vmem:[%s4 + $0xdc] sm:$0xf]
  %v631 = vld [vmem:[%s4 + $0xe0] sm:$0xf]
  %v632 = vld [vmem:[%s4 + $0xe4] sm:$0xf]
  %v633 = vld [vmem:[%s4 + $0xe8] sm:$0xf]
  %v634 = vld [vmem:[%s4 + $0xec] sm:$0xf]
  %v635 = vld [vmem:[%s4 + $0xf0] sm:$0xf]
  %v636 = vld [vmem:[%s4 + $0xf4] sm:$0xf]
  %v637 = vld [vmem:[%s4 + $0xf8] sm:$0xf]
  %v638 = vld [vmem:[%s4 + $0xfc] sm:$0xf]
  %v703 = vunpack.c.l.b16 %v575
  %v704 = vunpack.c.l.b16 %v576
  %v705 = vunpack.c.l.b16 %v577
  %v706 = vunpack.c.l.b16 %v578
  %v707 = vunpack.c.l.b16 %v579
  %v708 = vunpack.c.l.b16 %v580
  %v709 = vunpack.c.l.b16 %v581
  %v710 = vunpack.c.l.b16 %v582
  %v711 = vunpack.c.l.b16 %v583
  %v712 = vunpack.c.l.b16 %v584
  %v713 = vunpack.c.l.b16 %v585
  %v714 = vunpack.c.l.b16 %v586
  %v715 = vunpack.c.l.b16 %v587
  %v716 = vunpack.c.l.b16 %v588
  %v717 = vunpack.c.l.b16 %v589
  %v718 = vunpack.c.l.b16 %v590
  %v719 = vunpack.c.l.b16 %v591
  %v720 = vunpack.c.l.b16 %v592
  %v721 = vunpack.c.l.b16 %v593
  %v722 = vunpack.c.l.b16 %v594
  %v723 = vunpack.c.l.b16 %v595
  %v724 = vunpack.c.l.b16 %v596
  %v725 = vunpack.c.l.b16 %v597
  %v726 = vunpack.c.l.b16 %v598
  %v727 = vunpack.c.l.b16 %v599
  %v728 = vunpack.c.l.b16 %v600
  %v729 = vunpack.c.l.b16 %v601
  %v730 = vunpack.c.l.b16 %v602
  %v731 = vunpack.c.l.b16 %v603
  %v732 = vunpack.c.l.b16 %v604
  %v733 = vunpack.c.l.b16 %v605
  %v734 = vunpack.c.l.b16 %v606
  %v735 = vunpack.c.l.b16 %v607
  %v736 = vunpack.c.l.b16 %v608
  %v737 = vunpack.c.l.b16 %v609
  %v738 = vunpack.c.l.b16 %v610
  %v739 = vunpack.c.l.b16 %v611
  %v740 = vunpack.c.l.b16 %v612
  %v741 = vunpack.c.l.b16 %v613
  %v742 = vunpack.c.l.b16 %v614
  %v743 = vunpack.c.l.b16 %v615
  %v744 = vunpack.c.l.b16 %v616
  %v745 = vunpack.c.l.b16 %v617
  %v746 = vunpack.c.l.b16 %v618
  %v747 = vunpack.c.l.b16 %v619
  %v748 = vunpack.c.l.b16 %v620
  %v749 = vunpack.c.l.b16 %v621
  %v750 = vunpack.c.l.b16 %v622
  %v751 = vunpack.c.l.b16 %v623
  %v752 = vunpack.c.l.b16 %v624
  %v753 = vunpack.c.l.b16 %v625
  %v754 = vunpack.c.l.b16 %v626
  %v755 = vunpack.c.l.b16 %v627
  %v756 = vunpack.c.l.b16 %v628
  %v757 = vunpack.c.l.b16 %v629
  %v758 = vunpack.c.l.b16 %v630
  %v759 = vunpack.c.l.b16 %v631
  %v760 = vunpack.c.l.b16 %v632
  %v761 = vunpack.c.l.b16 %v633
  %v762 = vunpack.c.l.b16 %v634
  %v763 = vunpack.c.l.b16 %v635
  %v764 = vunpack.c.l.b16 %v636
  %v765 = vunpack.c.l.b16 %v637
  %v766 = vunpack.c.l.b16 %v638
  %v767 = vpack.c.b16 %v704, %v703
  %v768 = vpack.c.b16 %v706, %v705
  %v769 = vpack.c.b16 %v708, %v707
  %v770 = vpack.c.b16 %v710, %v709
  %v771 = vpack.c.b16 %v712, %v711
  %v772 = vpack.c.b16 %v714, %v713
  %v773 = vpack.c.b16 %v716, %v715
  %v774 = vpack.c.b16 %v718, %v717
  %v775 = vpack.c.b16 %v720, %v719
  %v776 = vpack.c.b16 %v722, %v721
  %v777 = vpack.c.b16 %v724, %v723
  %v778 = vpack.c.b16 %v726, %v725
  %v779 = vpack.c.b16 %v728, %v727
  %v780 = vpack.c.b16 %v730, %v729
  %v781 = vpack.c.b16 %v732, %v731
  %v782 = vpack.c.b16 %v734, %v733
  %v783 = vpack.c.b16 %v736, %v735
  %v784 = vpack.c.b16 %v738, %v737
  %v785 = vpack.c.b16 %v740, %v739
  %v786 = vpack.c.b16 %v742, %v741
  %v787 = vpack.c.b16 %v744, %v743
  %v788 = vpack.c.b16 %v746, %v745
  %v789 = vpack.c.b16 %v748, %v747
  %v790 = vpack.c.b16 %v750, %v749
  %v791 = vpack.c.b16 %v752, %v751
  %v792 = vpack.c.b16 %v754, %v753
  %v793 = vpack.c.b16 %v756, %v755
  %v794 = vpack.c.b16 %v758, %v757
  %v795 = vpack.c.b16 %v760, %v759
  %v796 = vpack.c.b16 %v762, %v761
  %v797 = vpack.c.b16 %v764, %v763
  %v798 = vpack.c.b16 %v766, %v765
  %831 = vmatprep.subr.bf16.mxu0 0
  %832 = vmatpush1.bf16.msra.mxu0 %v774
  %833 = vmatprep.subr.bf16.mxu0 0
  %834 = vmatpush1.bf16.msra.mxu0 %v773
  %835 = vmatprep.subr.bf16.mxu0 0
  %836 = vmatpush1.bf16.msra.mxu0 %v772
  %837 = vmatprep.subr.bf16.mxu0 0
  %838 = vmatpush1.bf16.msra.mxu0 %v771
  %839 = vmatprep.subr.bf16.mxu0 0
  %840 = vmatpush1.bf16.msra.mxu0 %v770
  %841 = vmatprep.subr.bf16.mxu0 0
  %842 = vmatpush1.bf16.msra.mxu0 %v769
  %843 = vmatprep.subr.bf16.mxu0 0
  %844 = vmatpush1.bf16.msra.mxu0 %v768
  %845 = vmatprep.subr.bf16.mxu0 0
  %846 = vmatpush1.bf16.msra.mxu0 %v767
  %847 = vmatprep.subr.bf16.mxu0 0
  %848 = vmatpush2.bf16.msra.mxu0 %v782
  %849 = vmatprep.subr.bf16.mxu0 0
  %850 = vmatpush2.bf16.msra.mxu0 %v781
  %851 = vmatprep.subr.bf16.mxu0 0
  %852 = vmatpush2.bf16.msra.mxu0 %v780
  %853 = vmatprep.subr.bf16.mxu0 0
  %854 = vmatpush2.bf16.msra.mxu0 %v779
  %855 = vmatprep.subr.bf16.mxu0 0
  %856 = vmatpush2.bf16.msra.mxu0 %v778
  %857 = vmatprep.subr.bf16.mxu0 0
  %858 = vmatpush2.bf16.msra.mxu0 %v777
  %859 = vmatprep.subr.bf16.mxu0 0
  %860 = vmatpush2.bf16.msra.mxu0 %v776
  %861 = vmatprep.subr.bf16.mxu0 0
  %862 = vmatpush2.bf16.msra.mxu0 %v775
  %863 = vmatprep.mubr.bf16.mxu0 %v560
  %864 = vmatmul.mubr.bf16.gmra.mxu0 %v559
  %v865 = vpop.f32.mrf.mxu0
  %v866 = vadd.f32 0.0, %v865
  %v867 = vpop.f32.mrf.mxu0
  %v868 = vpop.f32.mrf.mxu0
  %v869 = vadd.f32 0.0, %v868
  %v870 = vpop.f32.mrf.mxu0
  %871 = vmatprep.mubr.bf16.mxu0 %v564
  %872 = vmatmul.mubr.bf16.gmra.mxu0 %v563
  %v873 = vpop.f32.mrf.mxu0
  %v874 = vadd.f32 0.0, %v873
  %v875 = vpop.f32.mrf.mxu0
  %v876 = vpop.f32.mrf.mxu0
  %v877 = vadd.f32 0.0, %v876
  %v878 = vpop.f32.mrf.mxu0
  %879 = vmatprep.mubr.bf16.mxu0 %v568
  %880 = vmatmul.mubr.bf16.gmra.mxu0 %v567
  %v881 = vpop.f32.mrf.mxu0
  %v882 = vadd.f32 0.0, %v881
  %v883 = vpop.f32.mrf.mxu0
  %v884 = vpop.f32.mrf.mxu0
  %v885 = vadd.f32 0.0, %v884
  %v886 = vpop.f32.mrf.mxu0
  %887 = vmatprep.mubr.bf16.mxu0 %v572
  %888 = vmatmul.mubr.bf16.gmra.mxu0 %v571
  %v889 = vpop.f32.mrf.mxu0
  %v890 = vadd.f32 0.0, %v889
  %v891 = vpop.f32.mrf.mxu0
  %v892 = vpop.f32.mrf.mxu0
  %v893 = vadd.f32 0.0, %v892
  %v894 = vpop.f32.mrf.mxu0
  %895 = vdwg.mxu0
  %896 = vmatprep.subr.bf16.mxu0 0
  %897 = vmatpush1.bf16.msra.mxu0 %v790
  %898 = vmatprep.subr.bf16.mxu0 0
  %899 = vmatpush1.bf16.msra.mxu0 %v789
  %900 = vmatprep.subr.bf16.mxu0 0
  %901 = vmatpush1.bf16.msra.mxu0 %v788
  %902 = vmatprep.subr.bf16.mxu0 0
  %903 = vmatpush1.bf16.msra.mxu0 %v787
  %904 = vmatprep.subr.bf16.mxu0 0
  %905 = vmatpush1.bf16.msra.mxu0 %v786
  %906 = vmatprep.subr.bf16.mxu0 0
  %907 = vmatpush1.bf16.msra.mxu0 %v785
  %908 = vmatprep.subr.bf16.mxu0 0
  %909 = vmatpush1.bf16.msra.mxu0 %v784
  %910 = vmatprep.subr.bf16.mxu0 0
  %911 = vmatpush1.bf16.msra.mxu0 %v783
  %912 = vmatprep.subr.bf16.mxu0 0
  %913 = vmatpush2.bf16.msra.mxu0 %v798
  %914 = vmatprep.subr.bf16.mxu0 0
  %915 = vmatpush2.bf16.msra.mxu0 %v797
  %916 = vmatprep.subr.bf16.mxu0 0
  %917 = vmatpush2.bf16.msra.mxu0 %v796
  %918 = vmatprep.subr.bf16.mxu0 0
  %919 = vmatpush2.bf16.msra.mxu0 %v795
  %920 = vmatprep.subr.bf16.mxu0 0
  %921 = vmatpush2.bf16.msra.mxu0 %v794
  %922 = vmatprep.subr.bf16.mxu0 0
  %923 = vmatpush2.bf16.msra.mxu0 %v793
  %924 = vmatprep.subr.bf16.mxu0 0
  %925 = vmatpush2.bf16.msra.mxu0 %v792
  %926 = vmatprep.subr.bf16.mxu0 0
  %927 = vmatpush2.bf16.msra.mxu0 %v791
  %928 = vmatprep.mubr.bf16.mxu0 %v562
  %929 = vmatmul.mubr.bf16.gmra.mxu0 %v561
  %v930 = vpop.f32.mrf.mxu0
  %v931 = vadd.f32 %v866, %v930
  %v932 = vpop.f32.mrf.mxu0
  %v933 = vpop.f32.mrf.mxu0
  %v934 = vadd.f32 %v869, %v933
  %v935 = vpop.f32.mrf.mxu0
  %936 = vmatprep.mubr.bf16.mxu0 %v566
  %937 = vmatmul.mubr.bf16.gmra.mxu0 %v565
  %v938 = vpop.f32.mrf.mxu0
  %v939 = vadd.f32 %v874, %v938
  %v940 = vpop.f32.mrf.mxu0
  %v941 = vpop.f32.mrf.mxu0
  %v942 = vadd.f32 %v877, %v941
  %v943 = vpop.f32.mrf.mxu0
  %944 = vmatprep.mubr.bf16.mxu0 %v570
  %945 = vmatmul.mubr.bf16.gmra.mxu0 %v569
  %v946 = vpop.f32.mrf.mxu0
  %v947 = vadd.f32 %v882, %v946
  %v948 = vpop.f32.mrf.mxu0
  %v949 = vpop.f32.mrf.mxu0
  %v950 = vadd.f32 %v885, %v949
  %v951 = vpop.f32.mrf.mxu0
  %952 = vmatprep.mubr.bf16.mxu0 %v574
  %953 = vmatmul.mubr.bf16.gmra.mxu0 %v573
  %v954 = vpop.f32.mrf.mxu0
  %v955 = vadd.f32 %v890, %v954
  %v956 = vpop.f32.mrf.mxu0
  %v957 = vpop.f32.mrf.mxu0
  %v958 = vadd.f32 %v893, %v957
  %v959 = vpop.f32.mrf.mxu0
  %960 = vdwg.mxu0
  %v961 = vpack.c.bf16 %v934, %v931
  %v962 = vpack.c.bf16 %v942, %v939
  %v963 = vpack.c.bf16 %v950, %v947
  %v964 = vpack.c.bf16 %v958, %v955
  %v966 = vlaneseq
  %v967 = vshrl.u32 %v966, 7
  %v968 = vsub.s32 0, %v967
  %v969 = vrot.slane %v33, %v968
  %971 = vmatprep.subr.bf16.mxu0 0
  %972 = vmatpush1.bf16.msra.mxu0 0
  %973 = vmatprep.subr.bf16.mxu0 0
  %974 = vmatpush1.bf16.msra.mxu0 0
  %975 = vmatprep.subr.bf16.mxu0 0
  %976 = vmatpush1.bf16.msra.mxu0 0
  %977 = vmatprep.subr.bf16.mxu0 0
  %978 = vmatpush1.bf16.msra.mxu0 0
  %979 = vmatprep.subr.bf16.mxu0 0
  %980 = vmatpush1.bf16.msra.mxu0 %v964
  %981 = vmatprep.subr.bf16.mxu0 0
  %982 = vmatpush1.bf16.msra.mxu0 %v963
  %983 = vmatprep.subr.bf16.mxu0 0
  %984 = vmatpush1.bf16.msra.mxu0 %v962
  %985 = vmatprep.subr.bf16.mxu0 0
  %986 = vmatpush1.bf16.msra.mxu0 %v961
  %987 = vmatprep.subr.bf16.mxu0 0
  %988 = vmatpush2.bf16.msra.mxu0 0
  %989 = vmatprep.subr.bf16.mxu0 0
  %990 = vmatpush2.bf16.msra.mxu0 0
  %991 = vmatprep.subr.bf16.mxu0 0
  %992 = vmatpush2.bf16.msra.mxu0 0
  %993 = vmatprep.subr.bf16.mxu0 0
  %994 = vmatpush2.bf16.msra.mxu0 0
  %995 = vmatprep.subr.bf16.mxu0 0
  %996 = vmatpush2.bf16.msra.mxu0 0
  %997 = vmatprep.subr.bf16.mxu0 0
  %998 = vmatpush2.bf16.msra.mxu0 0
  %999 = vmatprep.subr.bf16.mxu0 0
  %1000 = vmatpush2.bf16.msra.mxu0 0
  %1001 = vmatprep.subr.bf16.mxu0 0
  %1002 = vmatpush2.bf16.msra.mxu0 0
  %1003 = vmatprep.mubr.bf16.mxu0 0
  %1004 = vmatmul.mubr.bf16.gmra.mxu0 %v88
  %v1005 = vpop.f32.mrf.mxu0
  %v1006 = vadd.f32 %v969, %v1005
  %v1007 = vpop.f32.mrf.mxu0
  %v1008 = vpop.f32.mrf.mxu0
  %v1009 = vadd.f32 %v969, %v1008
  %v1010 = vpop.f32.mrf.mxu0
  %1011 = vmatprep.mubr.bf16.mxu0 0
  %1012 = vmatmul.mubr.bf16.gmra.mxu0 %v91
  %v1013 = vpop.f32.mrf.mxu0
  %v1014 = vadd.f32 %v969, %v1013
  %v1015 = vpop.f32.mrf.mxu0
  %v1016 = vpop.f32.mrf.mxu0
  %v1017 = vadd.f32 %v969, %v1016
  %v1018 = vpop.f32.mrf.mxu0
  %1019 = vmatprep.mubr.bf16.mxu0 0
  %1020 = vmatmul.mubr.bf16.gmra.mxu0 %v94
  %v1021 = vpop.f32.mrf.mxu0
  %v1022 = vadd.f32 %v969, %v1021
  %v1023 = vpop.f32.mrf.mxu0
  %v1024 = vpop.f32.mrf.mxu0
  %v1025 = vadd.f32 %v969, %v1024
  %v1026 = vpop.f32.mrf.mxu0
  %1027 = vmatprep.mubr.bf16.mxu0 0
  %1028 = vmatmul.mubr.bf16.gmra.mxu0 %v97
  %v1029 = vpop.f32.mrf.mxu0
  %v1030 = vadd.f32 %v969, %v1029
  %v1031 = vpop.f32.mrf.mxu0
  %v1032 = vpop.f32.mrf.mxu0
  %v1033 = vadd.f32 %v969, %v1032
  %v1034 = vpop.f32.mrf.mxu0
  %1035 = vdwg.mxu0
  %1036 = vmax.xlane.f32.xlu0 %v1006
  %v1037 = vpop.xlane.xlu0 %1036
  %1038 = vmax.xlane.f32.xlu0 %v1009
  %v1039 = vpop.xlane.xlu0 %1038
  %1040 = vmax.xlane.f32.xlu0 %v1014
  %v1041 = vpop.xlane.xlu0 %1040
  %1042 = vmax.xlane.f32.xlu0 %v1017
  %v1043 = vpop.xlane.xlu0 %1042
  %1044 = vmax.xlane.f32.xlu0 %v1022
  %v1045 = vpop.xlane.xlu0 %1044
  %1046 = vmax.xlane.f32.xlu0 %v1025
  %v1047 = vpop.xlane.xlu0 %1046
  %1048 = vmax.xlane.f32.xlu0 %v1030
  %v1049 = vpop.xlane.xlu0 %1048
  %1050 = vmax.xlane.f32.xlu0 %v1033
  %v1051 = vpop.xlane.xlu0 %1050
  %v1052 = vsub.f32 %v1006, %v1037
  %v1053 = vsub.f32 %v1009, %v1039
  %v1054 = vsub.f32 %v1014, %v1041
  %v1055 = vsub.f32 %v1017, %v1043
  %v1056 = vsub.f32 %v1022, %v1045
  %v1057 = vsub.f32 %v1025, %v1047
  %v1058 = vsub.f32 %v1030, %v1049
  %v1059 = vsub.f32 %v1033, %v1051
  %v1060 = vmul.f32 %v1052, 1.442695
  %v1061 = vpow.pop %v1060
  %v1062 = vmul.f32 %v1053, 1.442695
  %v1063 = vpow.pop %v1062
  %v1064 = vmul.f32 %v1054, 1.442695
  %v1065 = vpow.pop %v1064
  %v1066 = vmul.f32 %v1055, 1.442695
  %v1067 = vpow.pop %v1066
  %v1068 = vmul.f32 %v1056, 1.442695
  %v1069 = vpow.pop %v1068
  %v1070 = vmul.f32 %v1057, 1.442695
  %v1071 = vpow.pop %v1070
  %v1072 = vmul.f32 %v1058, 1.442695
  %v1073 = vpow.pop %v1072
  %v1074 = vmul.f32 %v1059, 1.442695
  %v1075 = vpow.pop %v1074
  %1076 = vadd.xlane.f32.xlu0 %v1061
  %v1077 = vpop.xlane.xlu0 %1076
  %1078 = vadd.xlane.f32.xlu0 %v1063
  %v1079 = vpop.xlane.xlu0 %1078
  %1080 = vadd.xlane.f32.xlu0 %v1065
  %v1081 = vpop.xlane.xlu0 %1080
  %1082 = vadd.xlane.f32.xlu0 %v1067
  %v1083 = vpop.xlane.xlu0 %1082
  %1084 = vadd.xlane.f32.xlu0 %v1069
  %v1085 = vpop.xlane.xlu0 %1084
  %1086 = vadd.xlane.f32.xlu0 %v1071
  %v1087 = vpop.xlane.xlu0 %1086
  %1088 = vadd.xlane.f32.xlu0 %v1073
  %v1089 = vpop.xlane.xlu0 %1088
  %1090 = vadd.xlane.f32.xlu0 %v1075
  %v1091 = vpop.xlane.xlu0 %1090
  %v1092 = vlog2.pop %v1077
  %v1093 = vmul.f32 %v1092, 0.6931472
  %v1094 = vlog2.pop %v1079
  %v1095 = vmul.f32 %v1094, 0.6931472
  %v1096 = vlog2.pop %v1081
  %v1097 = vmul.f32 %v1096, 0.6931472
  %v1098 = vlog2.pop %v1083
  %v1099 = vmul.f32 %v1098, 0.6931472
  %v1100 = vlog2.pop %v1085
  %v1101 = vmul.f32 %v1100, 0.6931472
  %v1102 = vlog2.pop %v1087
  %v1103 = vmul.f32 %v1102, 0.6931472
  %v1104 = vlog2.pop %v1089
  %v1105 = vmul.f32 %v1104, 0.6931472
  %v1106 = vlog2.pop %v1091
  %v1107 = vmul.f32 %v1106, 0.6931472
  %v1108 = vsub.f32 %v1052, %v1093
  %v1109 = vsub.f32 %v1053, %v1095
  %v1110 = vsub.f32 %v1054, %v1097
  %v1111 = vsub.f32 %v1055, %v1099
  %v1112 = vsub.f32 %v1056, %v1101
  %v1113 = vsub.f32 %v1057, %v1103
  %v1114 = vsub.f32 %v1058, %v1105
  %v1115 = vsub.f32 %v1059, %v1107
  %1116 = vst [vmem:[%s6] sm:$0xff] %v1108
  %1117 = vst [vmem:[%s6 + $0x8] sm:$0xff] %v1109
  %1118 = vst [vmem:[%s6 + $0x10] sm:$0xff] %v1110
  %1119 = vst [vmem:[%s6 + $0x18] sm:$0xff] %v1111
  %1120 = vst [vmem:[%s6 + $0x20] sm:$0xff] %v1112
  %1121 = vst [vmem:[%s6 + $0x28] sm:$0xff] %v1113
  %1122 = vst [vmem:[%s6 + $0x30] sm:$0xff] %v1114
  %1123 = vst [vmem:[%s6 + $0x38] sm:$0xff] %v1115
  // Predicated region
  $region26: #{gnn_forward.1} parent=0 // pred_check
    _
  $region27: #{gnn_forward.1} parent=0 // pred_check_branch
    %1125 = sbr.rel (0) target = $region29
  $region28: #{gnn_forward.1} parent=0 // pred_region
    _
  $region29: #{gnn_forward.1} parent=0 // pred_fallthru
    _
  // Predicated region
  $region30: #{gnn_forward.1} parent=0 // pred_check
    _
  $region31: #{gnn_forward.1} parent=0 // pred_check_branch
    %1127 = sbr.rel (0) target = $region33
  $region32: #{gnn_forward.1} parent=0 // pred_region
    _
  $region33: #{gnn_forward.1} parent=0 // pred_fallthru
    _

</llo_original>
